<compile_context>
chip_gen: v7x
topology: tpu7x:2x2x1
jax: 0.10.0
libtpu: 0.0.40
codegen_flags: <defaults>
</compile_context>

<pallas_src>
import functools

import jax
import jax.numpy as jnp
from jax.experimental import pallas as pl
from jax.experimental.pallas import tpu as pltpu


_LANES = 128
_MAX_BLOCK_ROWS = 4096  # (4096, 128) f32 = 2 MiB per input tile.


def _dice_partial_kernel(p_ref, h_ref, inter_ref, total_ref, *,
                         total_rows, block_rows, inner_steps, needs_mask):
    """Accumulate per-lane partial sums of p*h and p+h into the output refs."""
    i = pl.program_id(0)  # outer ("parallel") axis -> per-core partials
    j = pl.program_id(1)  # inner ("arbitrary") reduction axis

    @pl.when(j == 0)
    def _():
        inter_ref[...] = jnp.zeros_like(inter_ref)
        total_ref[...] = jnp.zeros_like(total_ref)

    p = p_ref[...].astype(jnp.float32)
    h = h_ref[...].astype(jnp.float32)

    if needs_mask:
        # Logical (unclamped) row-block index; rows past `total_rows` (the
        # padded tail of the last real block and any duplicated overflow
        # blocks from grid rounding) are zeroed before the sums.
        logical_block = i * inner_steps + j
        row0 = logical_block * block_rows
        rid = jax.lax.broadcasted_iota(jnp.int32, (block_rows, 1), 0) + row0
        valid = rid < total_rows
        p = jnp.where(valid, p, 0.0)
        h = jnp.where(valid, h, 0.0)

    inter_partial = jnp.sum(p * h, axis=0, keepdims=True)   # (1, 128)
    total_partial = jnp.sum(p + h, axis=0, keepdims=True)   # (1, 128)
    inter_ref[...] += inter_partial[None]                   # (1, 1, 128)
    total_ref[...] += total_partial[None]


def dice_loss(y_pred, y_hat, smooth=1.0, max_block_rows=_MAX_BLOCK_ROWS):
    """Pallas TPU implementation of DiceLoss.forward. Returns a scalar float32."""
    assert y_pred.shape == y_hat.shape, "y_pred and y_hat must have the same shape"

    p_flat = jnp.ravel(y_pred)   # keep native dtype; cast happens on-chip
    h_flat = jnp.ravel(y_hat)
    n = p_flat.shape[0]

    rows = n // _LANES
    bulk = rows * _LANES

    inter = jnp.float32(0.0)
    total = jnp.float32(0.0)

    if rows > 0:
        p2d = p_flat[:bulk].reshape(rows, _LANES)
        h2d = h_flat[:bulk].reshape(rows, _LANES)

        # Row-block tiling: a single full-height block for small inputs
        # (block == full array dim, always layout-legal), else MiB-scale blocks.
        block_rows = rows if rows <= max_block_rows else max_block_rows
        num_blocks = -(-rows // block_rows)
        n_outer = 2 if num_blocks >= 2 else 1   # 2 TensorCores on v7x; harmless elsewhere
        inner_steps = -(-num_blocks // n_outer)
        # Mask when the last block is partial or the grid overshoots num_blocks.
        needs_mask = (n_outer * inner_steps * block_rows) != rows

        def in_map(i, j):
            # Clamp so overflow grid steps re-read the last real block
            # (their contribution is fully masked out inside the kernel).
            b = jnp.minimum(i * inner_steps + j, num_blocks - 1)
            return (b, 0)

        out_map = lambda i, j: (i, 0, 0)

        kernel = functools.partial(
            _dice_partial_kernel,
            total_rows=rows,
            block_rows=block_rows,
            inner_steps=inner_steps,
            needs_mask=needs_mask,
        )

        out_inter, out_total = pl.pallas_call(
            kernel,
            out_shape=(
                jax.ShapeDtypeStruct((n_outer, 1, _LANES), jnp.float32),
                jax.ShapeDtypeStruct((n_outer, 1, _LANES), jnp.float32),
            ),
            grid_spec=pltpu.PrefetchScalarGridSpec(
                num_scalar_prefetch=0,
                grid=(n_outer, inner_steps),
                in_specs=[
                    pl.BlockSpec((block_rows, _LANES), in_map),
                    pl.BlockSpec((block_rows, _LANES), in_map),
                ],
                out_specs=[
                    pl.BlockSpec((1, 1, _LANES), out_map),
                    pl.BlockSpec((1, 1, _LANES), out_map),
                ],
            ),
            compiler_params=pltpu.CompilerParams(
                dimension_semantics=("parallel", "arbitrary"),
                vmem_limit_bytes=32 * 1024 * 1024,
            ),
        )(p2d, h2d)

        inter = inter + jnp.sum(out_inter)
        total = total + jnp.sum(out_total)

    if bulk < n:
        # Tiny (<128 element) tail: plain JAX, avoids a full-array pad copy.
        tp = p_flat[bulk:].astype(jnp.float32)
        th = h_flat[bulk:].astype(jnp.float32)
        inter = inter + jnp.sum(tp * th)
        total = total + jnp.sum(tp) + jnp.sum(th)

    smooth = jnp.float32(smooth)
    dice = (2.0 * inter + smooth) / (total + smooth)
    return jnp.float32(1.0) - dice


def dice_loss_ref(y_pred, y_hat, smooth=1.0):
    """Pure-JAX reference matching the PyTorch module exactly."""
    p = jnp.ravel(y_pred).astype(jnp.float32)
    h = jnp.ravel(y_hat).astype(jnp.float32)
    inter = jnp.sum(p * h)
    dice = (2.0 * inter + smooth) / (jnp.sum(p) + jnp.sum(h) + smooth)
    return 1.0 - dice


if __name__ == "__main__":
    key = jax.random.PRNGKey(0)
    k1, k2, k3, k4 = jax.random.split(key, 4)

    # Test 1: small NCHW f32 inputs (batch=2, ch=4, 16x16), default tiling.
    y_pred = jax.nn.sigmoid(jax.random.normal(k1, (2, 4, 16, 16), dtype=jnp.float32))
    y_hat = (jax.random.uniform(k2, (2, 4, 16, 16)) > 0.5).astype(jnp.float32)
    out = jax.block_until_ready(dice_loss(y_pred, y_hat, smooth=1.0))
    ref = dice_loss_ref(y_pred, y_hat, smooth=1.0)
    assert jnp.allclose(out, ref, rtol=2e-5, atol=1e-5), (out, ref)

    # Test 2: bf16 inputs passed straight through (no wrapper upcast).
    out = jax.block_until_ready(
        dice_loss(y_pred.astype(jnp.bfloat16), y_hat.astype(jnp.bfloat16), smooth=1.0))
    ref = dice_loss_ref(y_pred.astype(jnp.bfloat16), y_hat.astype(jnp.bfloat16), smooth=1.0)
    assert jnp.allclose(out, ref, rtol=2e-5, atol=1e-5), (out, ref)

    # Test 3: multi-block path with the 2-wide parallel outer axis, a partial
    # last row-block, and a clamped/masked overflow grid step.
    yp3 = jax.nn.sigmoid(jax.random.normal(k3, (2, 4, 48, 48), dtype=jnp.float32))
    yh3 = (jax.random.uniform(k4, (2, 4, 48, 48)) > 0.5).astype(jnp.float32)
    out = jax.block_until_ready(dice_loss(yp3, yh3, smooth=1.0, max_block_rows=64))
    ref = dice_loss_ref(yp3, yh3, smooth=1.0)
    assert jnp.allclose(out, ref, rtol=2e-5, atol=1e-5), (out, ref)

    # Test 4: element count not divisible by 128 (kernel bulk + tiny JAX tail).
    yp4 = jax.nn.sigmoid(jax.random.normal(k3, (2, 3, 15, 17), dtype=jnp.float32))
    yh4 = (jax.random.uniform(k4, (2, 3, 15, 17)) > 0.5).astype(jnp.float32)
    out = jax.block_until_ready(dice_loss(yp4, yh4, smooth=1.0))
    ref = dice_loss_ref(yp4, yh4, smooth=1.0)
    assert jnp.allclose(out, ref, rtol=2e-5, atol=1e-5), (out, ref)

    print("KERNEL_OK")
</pallas_src>

<mosaic_0001>
module attributes {stable_mosaic.version = 11 : i64} {
  func.func @_dice_partial_kernel(%arg0: i32, %arg1: i32, %arg2: memref<16x128xf32, #tpu.memory_space<vmem>>, %arg3: memref<16x128xf32, #tpu.memory_space<vmem>>, %arg4: memref<1x1x128xf32, #tpu.memory_space<vmem>>, %arg5: memref<1x1x128xf32, #tpu.memory_space<vmem>>) attributes {dimension_semantics = [#tpu.dimension_semantics<parallel>, #tpu.dimension_semantics<arbitrary>], iteration_bounds = array<i64: 1, 1>, scalar_prefetch = 0 : i64, scratch_operands = 0 : i64, tpu.core_type = #tpu.core_type<tc>, window_params = [{transform_indices = @transform_0, window_bounds = array<i64: 16, 128>}, {transform_indices = @transform_1, window_bounds = array<i64: 16, 128>}, {transform_indices = @transform_2, window_bounds = array<i64: 1, 1, 128>}, {transform_indices = @transform_3, window_bounds = array<i64: 1, 1, 128>}]} {
    %c0_i32 = arith.constant 0 : i32
    %0 = arith.cmpi eq, %arg1, %c0_i32 : i32
    %1 = arith.extui %0 : i1 to i32
    %c0_i32_0 = arith.constant 0 : i32
    %2 = arith.cmpi ne, %1, %c0_i32_0 : i32
    scf.if %2 {
      %cst_17 = arith.constant 0.000000e+00 : f32
      %19 = vector.broadcast %cst_17 : f32 to vector<1x1x128xf32>
      %c0_18 = arith.constant 0 : index
      %c0_19 = arith.constant 0 : index
      %c0_20 = arith.constant 0 : index
      %20 = vector.load %arg4[%c0_18, %c0_19, %c0_20] : memref<1x1x128xf32, #tpu.memory_space<vmem>>, vector<1x1x128xf32>
      tpu.vector_store %arg4[%c0_18, %c0_19, %c0_20], %19 {strides = array<i32>} : memref<1x1x128xf32, #tpu.memory_space<vmem>>, vector<1x1x128xf32>,
      %cst_21 = arith.constant 0.000000e+00 : f32
      %21 = vector.broadcast %cst_21 : f32 to vector<1x1x128xf32>
      %c0_22 = arith.constant 0 : index
      %c0_23 = arith.constant 0 : index
      %c0_24 = arith.constant 0 : index
      %22 = vector.load %arg5[%c0_22, %c0_23, %c0_24] : memref<1x1x128xf32, #tpu.memory_space<vmem>>, vector<1x1x128xf32>
      tpu.vector_store %arg5[%c0_22, %c0_23, %c0_24], %21 {strides = array<i32>} : memref<1x1x128xf32, #tpu.memory_space<vmem>>, vector<1x1x128xf32>,
    } else {
    }
    %c0 = arith.constant 0 : index
    %c0_1 = arith.constant 0 : index
    %3 = vector.load %arg2[%c0, %c0_1] : memref<16x128xf32, #tpu.memory_space<vmem>>, vector<16x128xf32>
    %c0_2 = arith.constant 0 : index
    %c0_3 = arith.constant 0 : index
    %4 = vector.load %arg3[%c0_2, %c0_3] : memref<16x128xf32, #tpu.memory_space<vmem>>, vector<16x128xf32>
    %5 = arith.mulf %3, %4 : vector<16x128xf32>
    %cst = arith.constant dense<0.000000e+00> : vector<128xf32>
    %6 = vector.multi_reduction <add>, %5, %cst [0] : vector<16x128xf32> to vector<128xf32>
    %7 = vector.shape_cast %6 : vector<128xf32> to vector<1x128xf32>
    %8 = arith.addf %3, %4 : vector<16x128xf32>
    %cst_4 = arith.constant dense<0.000000e+00> : vector<128xf32>
    %9 = vector.multi_reduction <add>, %8, %cst_4 [0] : vector<16x128xf32> to vector<128xf32>
    %10 = vector.shape_cast %9 : vector<128xf32> to vector<1x128xf32>
    %c0_5 = arith.constant 0 : index
    %c0_6 = arith.constant 0 : index
    %c0_7 = arith.constant 0 : index
    %11 = vector.load %arg4[%c0_5, %c0_6, %c0_7] : memref<1x1x128xf32, #tpu.memory_space<vmem>>, vector<1x1x128xf32>
    %12 = vector.shape_cast %7 : vector<1x128xf32> to vector<1x1x128xf32>
    %13 = arith.addf %11, %12 : vector<1x1x128xf32>
    %c0_8 = arith.constant 0 : index
    %c0_9 = arith.constant 0 : index
    %c0_10 = arith.constant 0 : index
    %14 = vector.load %arg4[%c0_8, %c0_9, %c0_10] : memref<1x1x128xf32, #tpu.memory_space<vmem>>, vector<1x1x128xf32>
    tpu.vector_store %arg4[%c0_8, %c0_9, %c0_10], %13 {strides = array<i32>} : memref<1x1x128xf32, #tpu.memory_space<vmem>>, vector<1x1x128xf32>,
    %c0_11 = arith.constant 0 : index
    %c0_12 = arith.constant 0 : index
    %c0_13 = arith.constant 0 : index
    %15 = vector.load %arg5[%c0_11, %c0_12, %c0_13] : memref<1x1x128xf32, #tpu.memory_space<vmem>>, vector<1x1x128xf32>
    %16 = vector.shape_cast %10 : vector<1x128xf32> to vector<1x1x128xf32>
    %17 = arith.addf %15, %16 : vector<1x1x128xf32>
    %c0_14 = arith.constant 0 : index
    %c0_15 = arith.constant 0 : index
    %c0_16 = arith.constant 0 : index
    %18 = vector.load %arg5[%c0_14, %c0_15, %c0_16] : memref<1x1x128xf32, #tpu.memory_space<vmem>>, vector<1x1x128xf32>
    tpu.vector_store %arg5[%c0_14, %c0_15, %c0_16], %17 {strides = array<i32>} : memref<1x1x128xf32, #tpu.memory_space<vmem>>, vector<1x1x128xf32>,
    return
  }
  func.func @transform_0(%arg0: i32, %arg1: i32) -> (i32, i32) {
    %c1_i32 = arith.constant 1 : i32
    %0 = arith.muli %arg0, %c1_i32 : i32
    %1 = arith.addi %0, %arg1 : i32
    %c0_i32 = arith.constant 0 : i32
    %2 = arith.minsi %1, %c0_i32 : i32
    %c0_i32_0 = arith.constant 0 : i32
    %c0_i32_1 = arith.constant 0 : i32
    return %2, %c0_i32_0 : i32, i32
  }
  func.func @transform_1(%arg0: i32, %arg1: i32) -> (i32, i32) {
    %c1_i32 = arith.constant 1 : i32
    %0 = arith.muli %arg0, %c1_i32 : i32
    %1 = arith.addi %0, %arg1 : i32
    %c0_i32 = arith.constant 0 : i32
    %2 = arith.minsi %1, %c0_i32 : i32
    %c0_i32_0 = arith.constant 0 : i32
    %c0_i32_1 = arith.constant 0 : i32
    return %2, %c0_i32_0 : i32, i32
  }
  func.func @transform_2(%arg0: i32, %arg1: i32) -> (i32, i32, i32) {
    %c0_i32 = arith.constant 0 : i32
    %c0_i32_0 = arith.constant 0 : i32
    %c0_i32_1 = arith.constant 0 : i32
    return %arg0, %c0_i32, %c0_i32_0 : i32, i32, i32
  }
  func.func @transform_3(%arg0: i32, %arg1: i32) -> (i32, i32, i32) {
    %c0_i32 = arith.constant 0 : i32
    %c0_i32_0 = arith.constant 0 : i32
    %c0_i32_1 = arith.constant 0 : i32
    return %arg0, %c0_i32, %c0_i32_0 : i32, i32, i32
  }
}

</mosaic_0001>

<llo_original>
// kernel: tpu_custom_call.1
$region0: #{tpu_custom_call.1}
  #allocation0 [shape = 'u32[]', space=smem, size = 0x4, offset = 0x4, fixed_abs, tag = 'smem constant byte address 0x4 - core index']
  #allocation1 [shape = 'u32[144,128]{1,0:T(1,128)}', space=vmem, size = 0x12000, scoped, tag = 'internal scratch']
  %s0 = inlined_call_operand.hbm [shape: f32[16,128], index: 0, kind: input, shape index: {}]
  %s1 = inlined_call_operand.hbm [shape: f32[16,128], index: 1, kind: input, shape index: {}]
  %s2 = inlined_call_operand.hbm [shape: f32[1,1,128], index: 2, kind: output, shape index: {0}]
  %s3 = inlined_call_operand.hbm [shape: f32[1,1,128], index: 3, kind: output, shape index: {1}]
  %4 = xla_tuple %s2, %s3
  %s5 = sld [smem:[#allocation0]]
  $region38: #{tpu_custom_call.1} parent=0
    _
  %s7 = ssub.s32 1, %s5
  %s8 = scalar_select 0, %s7, %s5
  $region1: #{tpu_custom_call.1} parent=0
    #allocation2 [shape = 'u8[8192]{0}', space=vmem, size = 0x2000, scoped, tag = 'input window, operand 0, single buffered']
    #allocation3 [shape = 's32[1]{0}', space=sflag, size = 0x4, scoped, tag = 'scoped memory for tpu_custom_call.1']
    #allocation4 [shape = 's32[1]{0}', space=sflag, size = 0x4, scoped, tag = 'scoped memory for tpu_custom_call.1']
    #allocation5 [shape = 'u8[8192]{0}', space=vmem, size = 0x2000, scoped, tag = 'input window, operand 1, single buffered']
    #allocation6 [shape = 's32[1]{0}', space=sflag, size = 0x4, scoped, tag = 'scoped memory for tpu_custom_call.1']
    #allocation7 [shape = 'u8[512]{0}', space=vmem, size = 0x400, scoped, tag = 'output window, operand 0, single buffered']
    #allocation8 [shape = 'u8[512]{0}', space=vmem, size = 0x400, scoped, tag = 'output window, operand 1, single buffered']
    #allocation9 [shape = 's32[1]{0}', space=sflag, size = 0x4, scoped, tag = 'scoped memory for tpu_custom_call.1']
    %9 = vsyncpa [#allocation3], 0
    %10 = vsyncpa [#allocation6], 0
    %11 = vsyncpa [#allocation4], 0
    %12 = vsyncpa [#allocation9], 0
    // Predicated region
    $region2: #{tpu_custom_call.1} parent=1 // pred_check
      _
    $region3: #{tpu_custom_call.1} parent=1 // pred_check_branch
      %14 = sbr.rel (0) target = $region5
    $region4: #{tpu_custom_call.1} parent=1 // pred_region
      %s15 = sadd.s32 0, 0
      %p16 = scmp.lt.s32.totalorder %s15, 0
      %s17 = scalar_select %p16, %s15, 0
      %s18 = smul.u32 2, %s17
      %s20 = ssub.s32 256, 256
      %21 = vsyncadd [#allocation3], %s20
      %s22 = smul.addr %s18, 128
      %s23 = scalar_lea.hbm %s0, %s22
      %s24 = sshll.u32 [#allocation2], 4
      %s25 = int_to_ptr.vmem [resolvable:$true] %s24
      %30 = dma.hbm_to_vmem [thread:$0]  %s23, 256, %s25, [#allocation3], 128, 128, 8
    $region5: #{tpu_custom_call.1} parent=1 // pred_fallthru
      _
    // Predicated region
    $region6: #{tpu_custom_call.1} parent=1 // pred_check
      _
    $region7: #{tpu_custom_call.1} parent=1 // pred_check_branch
      %32 = sbr.rel (0) target = $region9
    $region8: #{tpu_custom_call.1} parent=1 // pred_region
      %s33 = sadd.s32 0, 0
      %p34 = scmp.lt.s32.totalorder %s33, 0
      %s35 = scalar_select %p34, %s33, 0
      %s36 = smul.u32 2, %s35
      %s38 = ssub.s32 256, 256
      %39 = vsyncadd [#allocation6], %s38
      %s40 = smul.addr %s36, 128
      %s41 = scalar_lea.hbm %s1, %s40
      %s42 = sshll.u32 [#allocation5], 4
      %s43 = int_to_ptr.vmem [resolvable:$true] %s42
      %48 = dma.hbm_to_vmem [thread:$0]  %s41, 256, %s43, [#allocation6], 128, 128, 8
    $region9: #{tpu_custom_call.1} parent=1 // pred_fallthru
      _
    // Predicated region
    $region10: #{tpu_custom_call.1} parent=1 // pred_check
      _
    $region11: #{tpu_custom_call.1} parent=1 // pred_check_branch
      %50 = sbr.rel (0) target = $region13
    $region12: #{tpu_custom_call.1} parent=1 // pred_region
      %51 = dma.done [#allocation3], 256
    $region13: #{tpu_custom_call.1} parent=1 // pred_fallthru
      _
    // Predicated region
    $region14: #{tpu_custom_call.1} parent=1 // pred_check
      _
    $region15: #{tpu_custom_call.1} parent=1 // pred_check_branch
      %53 = sbr.rel (0) target = $region17
    $region16: #{tpu_custom_call.1} parent=1 // pred_region
      %54 = dma.done [#allocation6], 256
    $region17: #{tpu_custom_call.1} parent=1 // pred_fallthru
      _
    %s55 = sadd.s32 0, 0
    %p56 = scmp.lt.s32.totalorder %s55, 0
    %s57 = scalar_select %p56, %s55, 0
    %s58 = smul.u32 2, %s57
    %s59 = sadd.s32 0, 0
    %p60 = scmp.lt.s32.totalorder %s59, 0
    %s61 = scalar_select %p60, %s59, 0
    %s62 = smul.u32 2, %s61
    %p63 = scmp.eq.s32.totalorder 0, 0
    // Predicated region
    $region18: #{tpu_custom_call.1} parent=1 // pred_check
      %p64 = pneg %p63
    $region19: #{tpu_custom_call.1} parent=1 // pred_check_branch
      %66 = sbr.rel (%p64) target = $region21
    $region20: #{tpu_custom_call.1} parent=1 // pred_region
      %67 = vst [vmem:[#allocation7] sm:$0x1] 0.0
      %68 = vst [vmem:[#allocation8] sm:$0x1] 0.0
    $region21: #{tpu_custom_call.1} parent=1 // pred_fallthru
      _
    %v69 = vld [vmem:[#allocation2] sm:$0xff]
    %v70 = vld [vmem:[#allocation2 + $0x8] sm:$0xff]
    %v71 = vld [vmem:[#allocation5] sm:$0xff]
    %v72 = vld [vmem:[#allocation5 + $0x8] sm:$0xff]
    %v73 = vmul.f32 %v69, %v71
    %v74 = vmul.f32 %v70, %v72
    %v75 = vadd.f32 %v73, %v74
    %v76 = vrot.slane %v75, 4
    %v77 = vadd.f32 %v75, %v76
    %v78 = vrot.slane %v77, 2
    %v79 = vadd.f32 %v77, %v78
    %v80 = vrot.slane %v79, 1
    %v81 = vadd.f32 %v79, %v80
    %v82 = vadd.f32 %v69, %v71
    %v83 = vadd.f32 %v70, %v72
    %v84 = vadd.f32 %v82, %v83
    %v85 = vrot.slane %v84, 4
    %v86 = vadd.f32 %v84, %v85
    %v87 = vrot.slane %v86, 2
    %v88 = vadd.f32 %v86, %v87
    %v89 = vrot.slane %v88, 1
    %v90 = vadd.f32 %v88, %v89
    %v91 = vld [vmem:[#allocation7] sm:$0x1]
    %v92 = vadd.f32 %v91, %v81
    %93 = vst [vmem:[#allocation7] sm:$0x1] %v92
    %v94 = vld [vmem:[#allocation8] sm:$0x1]
    %v95 = vadd.f32 %v94, %v90
    %96 = vst [vmem:[#allocation8] sm:$0x1] %v95
    // Predicated region
    $region22: #{tpu_custom_call.1} parent=1 // pred_check
      _
    $region23: #{tpu_custom_call.1} parent=1 // pred_check_branch
      %98 = sbr.rel (0) target = $region25
    $region24: #{tpu_custom_call.1} parent=1 // pred_region
      %s100 = ssub.s32 16, 16
      %101 = vsyncadd [#allocation4], %s100
      %s103 = sshll.u32 [#allocation7], 4
      %s104 = int_to_ptr.vmem [resolvable:$true] %s103
      %106 = dma.vmem_to_hbm [thread:$0]  %s104, 16, %s2, [#allocation4]
    $region25: #{tpu_custom_call.1} parent=1 // pred_fallthru
      _
    // Predicated region
    $region26: #{tpu_custom_call.1} parent=1 // pred_check
      _
    $region27: #{tpu_custom_call.1} parent=1 // pred_check_branch
      %108 = sbr.rel (0) target = $region29
    $region28: #{tpu_custom_call.1} parent=1 // pred_region
      %s110 = ssub.s32 16, 16
      %111 = vsyncadd [#allocation9], %s110
      %s113 = sshll.u32 [#allocation8], 4
      %s114 = int_to_ptr.vmem [resolvable:$true] %s113
      %116 = dma.vmem_to_hbm [thread:$0]  %s114, 16, %s3, [#allocation9]
    $region29: #{tpu_custom_call.1} parent=1 // pred_fallthru
      _
    // Predicated region
    $region30: #{tpu_custom_call.1} parent=1 // pred_check
      _
    $region31: #{tpu_custom_call.1} parent=1 // pred_check_branch
      %118 = sbr.rel (0) target = $region33
    $region32: #{tpu_custom_call.1} parent=1 // pred_region
      %119 = dma.done [#allocation4], 16
    $region33: #{tpu_custom_call.1} parent=1 // pred_fallthru
      _
    // Predicated region
    $region34: #{tpu_custom_call.1} parent=1 // pred_check
      _
    $region35: #{tpu_custom_call.1} parent=1 // pred_check_branch
      %121 = sbr.rel (0) target = $region37
    $region36: #{tpu_custom_call.1} parent=1 // pred_region
      %122 = dma.done [#allocation9], 16
    $region37: #{tpu_custom_call.1} parent=1 // pred_fallthru
      _
    %123 = vsyncpa [#allocation3], 1
    %124 = vsyncpa [#allocation6], 1
    %125 = vsyncpa [#allocation4], 1
    %126 = vsyncpa [#allocation9], 1

</llo_original>
